<compile_context>
chip_gen: v7x
topology: tpu7x:2x2x1
jax: 0.10.0
libtpu: 0.0.40
codegen_flags: <defaults>
</compile_context>

<pallas_src>
import functools
import math

import jax
import jax.numpy as jnp
from jax.experimental import pallas as pl
from jax.experimental.pallas import tpu as pltpu


MLP_DIMS = (3, 64, 64, 128, 256)  # Linear(3,64) -> (64,64) -> (64,128) -> (128,256)
_SQRT_2_OVER_PI = math.sqrt(2.0 / math.pi)


def _gelu_tanh(x):
    # tanh-approximate GELU: tanh lowers to the EUP (its own VLIW slot), keeping
    # the erf polynomial off the VALU.
    return 0.5 * x * (1.0 + jnp.tanh(_SQRT_2_OVER_PI * (x + 0.044715 * x * x * x)))


def _gelu_exact(x):
    # PyTorch nn.GELU() default (approximate='none') - used by the reference.
    return 0.5 * x * (1.0 + jax.lax.erf(x * (1.0 / math.sqrt(2.0))))


def _pointnet_kernel(x_ref, w1_ref, b1_ref, w2_ref, b2_ref, w3_ref, b3_ref,
                     w4_ref, b4_ref, o_ref, *, n_points, tile_n):
    # x_ref block: [1, TN, 3] f32; w1/b* f32; w2..w4 bf16; o_ref block: [1, 1, 256]
    k = pl.program_id(1)
    x = x_ref[0]                                                     # [TN, 3] f32

    # ---- Layer 1 (in=3): VPU broadcast-FMAs, keeps the K=3 contraction off the MXU.
    w1 = w1_ref[...]                                                 # [3, 64]
    h = (x[:, 0:1] * w1[0:1, :]
         + x[:, 1:2] * w1[1:2, :]
         + x[:, 2:3] * w1[2:3, :]
         + b1_ref[...])                                              # [TN, 64] f32
    h = _gelu_tanh(h)

    # ---- Layers 2-4: bf16 operands on the MXU, f32 accumulation.
    h = jnp.dot(h.astype(jnp.bfloat16), w2_ref[...],
                preferred_element_type=jnp.float32) + b2_ref[...]    # [TN, 64]
    h = _gelu_tanh(h)
    h = jnp.dot(h.astype(jnp.bfloat16), w3_ref[...],
                preferred_element_type=jnp.float32) + b3_ref[...]    # [TN, 128]
    h = _gelu_tanh(h)
    h = jnp.dot(h.astype(jnp.bfloat16), w4_ref[...],
                preferred_element_type=jnp.float32) + b4_ref[...]    # [TN, 256]

    # ---- Mask padded rows of the final partial tile before the max reduction.
    # Only emitted when a partial tile exists (static check); cheap VPU select.
    if n_points % tile_n != 0:
        row = k * tile_n + jax.lax.broadcasted_iota(jnp.int32, (tile_n, 1), 0)
        h = jnp.where(row < n_points, h, -jnp.inf)

    tile_max = jnp.max(h, axis=0, keepdims=True)                     # [1, 256]

    # Output block is resident across the k axis -> use it as the accumulator.
    @pl.when(k == 0)
    def _():
        o_ref[0] = tile_max

    @pl.when(k != 0)
    def _():
        o_ref[0] = jnp.maximum(o_ref[0], tile_max)


def pointnet_medium(x, params, *, tile_n=4096):
    """x: [B, N, 3] float32 -> [B, 256] float32."""
    B, N, C = x.shape
    assert C == 3
    (w1, b1), (w2, b2), (w3, b3), (w4, b4) = params
    out_dim = w4.shape[1]

    # Tile size for the point axis: full N if it fits, else a sublane-aligned
    # tile (TN=4096 -> ~8 MiB peak f32 activations per tile).
    tn = min(tile_n, N)
    if tn < N:
        tn = max(8, (tn // 8) * 8)
    num_n_tiles = pl.cdiv(N, tn)

    # bf16 weights for the MXU layers (accumulation stays f32 in-kernel);
    # layer 1 stays f32 since it runs as VPU FMAs.
    w2b = w2.astype(jnp.bfloat16)
    w3b = w3.astype(jnp.bfloat16)
    w4b = w4.astype(jnp.bfloat16)

    def full_spec(a):
        nd = a.ndim
        return pl.BlockSpec(a.shape, lambda b, k, _nd=nd: (0,) * _nd)

    kernel = functools.partial(_pointnet_kernel, n_points=N, tile_n=tn)

    flops = 2 * B * N * sum(di * do for di, do in zip(MLP_DIMS[:-1], MLP_DIMS[1:]))
    transcendentals = B * N * sum(MLP_DIMS[1:-1])
    bytes_accessed = (x.size * x.dtype.itemsize
                      + sum(w.size * w.dtype.itemsize + b.size * b.dtype.itemsize
                            for w, b in params)
                      + B * out_dim * 4)

    out = pl.pallas_call(
        kernel,
        out_shape=jax.ShapeDtypeStruct((B, 1, out_dim), jnp.float32),
        grid=(B, num_n_tiles),
        in_specs=[
            pl.BlockSpec((1, tn, C), lambda b, k: (b, k, 0)),
            full_spec(w1), full_spec(b1),
            full_spec(w2b), full_spec(b2),
            full_spec(w3b), full_spec(b3),
            full_spec(w4b), full_spec(b4),
        ],
        out_specs=pl.BlockSpec((1, 1, out_dim), lambda b, k: (b, 0, 0)),
        compiler_params=pltpu.CompilerParams(
            dimension_semantics=("parallel", "arbitrary")),
        cost_estimate=pl.CostEstimate(flops=flops,
                                      transcendentals=transcendentals,
                                      bytes_accessed=bytes_accessed),
    )(x, w1, b1, w2b, b2, w3b, b3, w4b, b4)
    return out.reshape(B, out_dim)


def init_params(key, dims=MLP_DIMS, dtype=jnp.float32):
    # Matches reset_parameters_: trunc_normal_(std=0.02) on weights, zero biases.
    params = []
    for i in range(len(dims) - 1):
        key, sub = jax.random.split(key)
        fan_in, fan_out = dims[i], dims[i + 1]
        w = 0.02 * jax.random.truncated_normal(sub, -2.0, 2.0, (fan_in, fan_out), dtype)
        b = jnp.zeros((1, fan_out), dtype)
        params.append((w, b))
    return params


def pointnet_medium_reference(x, params):
    # Pure-JAX reference of the PyTorch forward (exact-erf GELU, f32 matmuls).
    h = x
    n_layers = len(params)
    for i, (w, b) in enumerate(params):
        h = h @ w + b
        if i < n_layers - 1:
            h = _gelu_exact(h)
    return jnp.max(h, axis=1)


if __name__ == "__main__":
    key = jax.random.PRNGKey(0)
    k_params, k_x1, k_x2 = jax.random.split(key, 3)

    params = init_params(k_params)

    # Small shapes consistent with the module: x is [B, N, 3].
    B, N = 2, 16
    x = jax.random.normal(k_x1, (B, N, 3), dtype=jnp.float32)
    out = jax.block_until_ready(pointnet_medium(x, params))
    ref = jax.block_until_ready(pointnet_medium_reference(x, params))
    assert out.shape == (B, 256)
    assert jnp.allclose(out, ref, atol=5e-3, rtol=5e-3), "mismatch (N=16)"

    # Exercise the tiled path with a masked partial last tile (N=40, TN=16).
    x2 = jax.random.normal(k_x2, (B, 40, 3), dtype=jnp.float32)
    out2 = jax.block_until_ready(pointnet_medium(x2, params, tile_n=16))
    ref2 = jax.block_until_ready(pointnet_medium_reference(x2, params))
    assert jnp.allclose(out2, ref2, atol=5e-3, rtol=5e-3), "mismatch (N=40, tiled)"

    print("KERNEL_OK")
</pallas_src>

<mosaic_0001>
module attributes {stable_mosaic.version = 11 : i64} {
  func.func @_pointnet_kernel(%arg0: i32, %arg1: i32, %arg2: memref<1x16x3xf32, #tpu.memory_space<vmem>>, %arg3: memref<3x64xf32, #tpu.memory_space<vmem>>, %arg4: memref<1x64xf32, #tpu.memory_space<vmem>>, %arg5: memref<64x64xbf16, #tpu.memory_space<vmem>>, %arg6: memref<1x64xf32, #tpu.memory_space<vmem>>, %arg7: memref<64x128xbf16, #tpu.memory_space<vmem>>, %arg8: memref<1x128xf32, #tpu.memory_space<vmem>>, %arg9: memref<128x256xbf16, #tpu.memory_space<vmem>>, %arg10: memref<1x256xf32, #tpu.memory_space<vmem>>, %arg11: memref<1x1x256xf32, #tpu.memory_space<vmem>>) attributes {dimension_semantics = [#tpu.dimension_semantics<parallel>, #tpu.dimension_semantics<arbitrary>], iteration_bounds = array<i64: 2, 1>, scalar_prefetch = 0 : i64, scratch_operands = 0 : i64, tpu.core_type = #tpu.core_type<tc>, window_params = [{transform_indices = @transform_0, window_bounds = array<i64: 1, 16, 3>}, {pipeline_mode = #tpu.pipeline_mode<synchronous>, transform_indices = @transform_1, window_bounds = array<i64: 3, 64>}, {pipeline_mode = #tpu.pipeline_mode<synchronous>, transform_indices = @transform_2, window_bounds = array<i64: 1, 64>}, {pipeline_mode = #tpu.pipeline_mode<synchronous>, transform_indices = @transform_3, window_bounds = array<i64: 64, 64>}, {pipeline_mode = #tpu.pipeline_mode<synchronous>, transform_indices = @transform_4, window_bounds = array<i64: 1, 64>}, {pipeline_mode = #tpu.pipeline_mode<synchronous>, transform_indices = @transform_5, window_bounds = array<i64: 64, 128>}, {pipeline_mode = #tpu.pipeline_mode<synchronous>, transform_indices = @transform_6, window_bounds = array<i64: 1, 128>}, {pipeline_mode = #tpu.pipeline_mode<synchronous>, transform_indices = @transform_7, window_bounds = array<i64: 128, 256>}, {pipeline_mode = #tpu.pipeline_mode<synchronous>, transform_indices = @transform_8, window_bounds = array<i64: 1, 256>}, {transform_indices = @transform_9, window_bounds = array<i64: 1, 1, 256>}]} {
    %c0 = arith.constant 0 : index
    %c0_0 = arith.constant 0 : index
    %c0_1 = arith.constant 0 : index
    %0 = vector.load %arg2[%c0, %c0_0, %c0_1] : memref<1x16x3xf32, #tpu.memory_space<vmem>>, vector<1x16x3xf32>
    %1 = vector.shape_cast %0 : vector<1x16x3xf32> to vector<16x3xf32>
    %c0_2 = arith.constant 0 : index
    %c0_3 = arith.constant 0 : index
    %2 = vector.load %arg3[%c0_2, %c0_3] : memref<3x64xf32, #tpu.memory_space<vmem>>, vector<3x64xf32>
    %3 = vector.extract_strided_slice %1 {offsets = [0, 0], sizes = [16, 1], strides = [1, 1]} : vector<16x3xf32> to vector<16x1xf32>
    %4 = vector.extract_strided_slice %2 {offsets = [0, 0], sizes = [1, 64], strides = [1, 1]} : vector<3x64xf32> to vector<1x64xf32>
    %5 = vector.broadcast %3 : vector<16x1xf32> to vector<16x64xf32>
    %6 = vector.broadcast %4 : vector<1x64xf32> to vector<16x64xf32>
    %7 = arith.mulf %5, %6 : vector<16x64xf32>
    %8 = vector.extract_strided_slice %1 {offsets = [0, 1], sizes = [16, 1], strides = [1, 1]} : vector<16x3xf32> to vector<16x1xf32>
    %9 = vector.extract_strided_slice %2 {offsets = [1, 0], sizes = [1, 64], strides = [1, 1]} : vector<3x64xf32> to vector<1x64xf32>
    %10 = vector.broadcast %8 : vector<16x1xf32> to vector<16x64xf32>
    %11 = vector.broadcast %9 : vector<1x64xf32> to vector<16x64xf32>
    %12 = arith.mulf %10, %11 : vector<16x64xf32>
    %13 = arith.addf %7, %12 : vector<16x64xf32>
    %14 = vector.extract_strided_slice %1 {offsets = [0, 2], sizes = [16, 1], strides = [1, 1]} : vector<16x3xf32> to vector<16x1xf32>
    %15 = vector.extract_strided_slice %2 {offsets = [2, 0], sizes = [1, 64], strides = [1, 1]} : vector<3x64xf32> to vector<1x64xf32>
    %16 = vector.broadcast %14 : vector<16x1xf32> to vector<16x64xf32>
    %17 = vector.broadcast %15 : vector<1x64xf32> to vector<16x64xf32>
    %18 = arith.mulf %16, %17 : vector<16x64xf32>
    %19 = arith.addf %13, %18 : vector<16x64xf32>
    %c0_4 = arith.constant 0 : index
    %c0_5 = arith.constant 0 : index
    %20 = vector.load %arg4[%c0_4, %c0_5] : memref<1x64xf32, #tpu.memory_space<vmem>>, vector<1x64xf32>
    %21 = vector.broadcast %20 : vector<1x64xf32> to vector<16x64xf32>
    %22 = arith.addf %19, %21 : vector<16x64xf32>
    %cst = arith.constant 5.000000e-01 : f32
    %23 = vector.broadcast %cst : f32 to vector<16x64xf32>
    %24 = arith.mulf %23, %22 : vector<16x64xf32>
    %cst_6 = arith.constant 4.471500e-02 : f32
    %25 = vector.broadcast %cst_6 : f32 to vector<16x64xf32>
    %26 = arith.mulf %25, %22 : vector<16x64xf32>
    %27 = arith.mulf %26, %22 : vector<16x64xf32>
    %28 = arith.mulf %27, %22 : vector<16x64xf32>
    %29 = arith.addf %22, %28 : vector<16x64xf32>
    %cst_7 = arith.constant 0.797884583 : f32
    %30 = vector.broadcast %cst_7 : f32 to vector<16x64xf32>
    %31 = arith.mulf %30, %29 : vector<16x64xf32>
    %32 = math.tanh %31 : vector<16x64xf32>
    %cst_8 = arith.constant 1.000000e+00 : f32
    %33 = vector.broadcast %cst_8 : f32 to vector<16x64xf32>
    %34 = arith.addf %33, %32 : vector<16x64xf32>
    %35 = arith.mulf %24, %34 : vector<16x64xf32>
    %36 = arith.truncf %35 : vector<16x64xf32> to vector<16x64xbf16>
    %c0_9 = arith.constant 0 : index
    %c0_10 = arith.constant 0 : index
    %37 = vector.load %arg5[%c0_9, %c0_10] : memref<64x64xbf16, #tpu.memory_space<vmem>>, vector<64x64xbf16>
    %cst_11 = arith.constant dense<0.000000e+00> : vector<16x64xf32>
    %38 = tpu.matmul %36, %37, %cst_11 {dimension_numbers = #tpu.dot_dimension_numbers<[1], [0], [0], [1], [0, 0, 1, 1], [], []>} : vector<16x64xbf16>, vector<64x64xbf16>, vector<16x64xf32> -> vector<16x64xf32>
    %c0_12 = arith.constant 0 : index
    %c0_13 = arith.constant 0 : index
    %39 = vector.load %arg6[%c0_12, %c0_13] : memref<1x64xf32, #tpu.memory_space<vmem>>, vector<1x64xf32>
    %40 = vector.broadcast %39 : vector<1x64xf32> to vector<16x64xf32>
    %41 = arith.addf %38, %40 : vector<16x64xf32>
    %cst_14 = arith.constant 5.000000e-01 : f32
    %42 = vector.broadcast %cst_14 : f32 to vector<16x64xf32>
    %43 = arith.mulf %42, %41 : vector<16x64xf32>
    %cst_15 = arith.constant 4.471500e-02 : f32
    %44 = vector.broadcast %cst_15 : f32 to vector<16x64xf32>
    %45 = arith.mulf %44, %41 : vector<16x64xf32>
    %46 = arith.mulf %45, %41 : vector<16x64xf32>
    %47 = arith.mulf %46, %41 : vector<16x64xf32>
    %48 = arith.addf %41, %47 : vector<16x64xf32>
    %cst_16 = arith.constant 0.797884583 : f32
    %49 = vector.broadcast %cst_16 : f32 to vector<16x64xf32>
    %50 = arith.mulf %49, %48 : vector<16x64xf32>
    %51 = math.tanh %50 : vector<16x64xf32>
    %cst_17 = arith.constant 1.000000e+00 : f32
    %52 = vector.broadcast %cst_17 : f32 to vector<16x64xf32>
    %53 = arith.addf %52, %51 : vector<16x64xf32>
    %54 = arith.mulf %43, %53 : vector<16x64xf32>
    %55 = arith.truncf %54 : vector<16x64xf32> to vector<16x64xbf16>
    %c0_18 = arith.constant 0 : index
    %c0_19 = arith.constant 0 : index
    %56 = vector.load %arg7[%c0_18, %c0_19] : memref<64x128xbf16, #tpu.memory_space<vmem>>, vector<64x128xbf16>
    %cst_20 = arith.constant dense<0.000000e+00> : vector<16x128xf32>
    %57 = tpu.matmul %55, %56, %cst_20 {dimension_numbers = #tpu.dot_dimension_numbers<[1], [0], [0], [1], [0, 0, 1, 1], [], []>} : vector<16x64xbf16>, vector<64x128xbf16>, vector<16x128xf32> -> vector<16x128xf32>
    %c0_21 = arith.constant 0 : index
    %c0_22 = arith.constant 0 : index
    %58 = vector.load %arg8[%c0_21, %c0_22] : memref<1x128xf32, #tpu.memory_space<vmem>>, vector<1x128xf32>
    %59 = vector.broadcast %58 : vector<1x128xf32> to vector<16x128xf32>
    %60 = arith.addf %57, %59 : vector<16x128xf32>
    %cst_23 = arith.constant 5.000000e-01 : f32
    %61 = vector.broadcast %cst_23 : f32 to vector<16x128xf32>
    %62 = arith.mulf %61, %60 : vector<16x128xf32>
    %cst_24 = arith.constant 4.471500e-02 : f32
    %63 = vector.broadcast %cst_24 : f32 to vector<16x128xf32>
    %64 = arith.mulf %63, %60 : vector<16x128xf32>
    %65 = arith.mulf %64, %60 : vector<16x128xf32>
    %66 = arith.mulf %65, %60 : vector<16x128xf32>
    %67 = arith.addf %60, %66 : vector<16x128xf32>
    %cst_25 = arith.constant 0.797884583 : f32
    %68 = vector.broadcast %cst_25 : f32 to vector<16x128xf32>
    %69 = arith.mulf %68, %67 : vector<16x128xf32>
    %70 = math.tanh %69 : vector<16x128xf32>
    %cst_26 = arith.constant 1.000000e+00 : f32
    %71 = vector.broadcast %cst_26 : f32 to vector<16x128xf32>
    %72 = arith.addf %71, %70 : vector<16x128xf32>
    %73 = arith.mulf %62, %72 : vector<16x128xf32>
    %74 = arith.truncf %73 : vector<16x128xf32> to vector<16x128xbf16>
    %c0_27 = arith.constant 0 : index
    %c0_28 = arith.constant 0 : index
    %75 = vector.load %arg9[%c0_27, %c0_28] : memref<128x256xbf16, #tpu.memory_space<vmem>>, vector<128x256xbf16>
    %cst_29 = arith.constant dense<0.000000e+00> : vector<16x256xf32>
    %76 = tpu.matmul %74, %75, %cst_29 {dimension_numbers = #tpu.dot_dimension_numbers<[1], [0], [0], [1], [0, 0, 1, 1], [], []>} : vector<16x128xbf16>, vector<128x256xbf16>, vector<16x256xf32> -> vector<16x256xf32>
    %c0_30 = arith.constant 0 : index
    %c0_31 = arith.constant 0 : index
    %77 = vector.load %arg10[%c0_30, %c0_31] : memref<1x256xf32, #tpu.memory_space<vmem>>, vector<1x256xf32>
    %78 = vector.broadcast %77 : vector<1x256xf32> to vector<16x256xf32>
    %79 = arith.addf %76, %78 : vector<16x256xf32>
    %cst_32 = arith.constant dense<0xFF800000> : vector<256xf32>
    %80 = vector.multi_reduction <maximumf>, %79, %cst_32 [0] : vector<16x256xf32> to vector<256xf32>
    %81 = vector.shape_cast %80 : vector<256xf32> to vector<1x256xf32>
    %c0_i32 = arith.constant 0 : i32
    %82 = arith.cmpi eq, %arg1, %c0_i32 : i32
    %83 = arith.extui %82 : i1 to i32
    %c0_i32_33 = arith.constant 0 : i32
    %84 = arith.cmpi ne, %83, %c0_i32_33 : i32
    scf.if %84 {
      %c0_36 = arith.constant 0 : index
      %c0_37 = arith.constant 0 : index
      %c0_38 = arith.constant 0 : index
      %88 = vector.load %arg11[%c0_36, %c0_37, %c0_38] : memref<1x1x256xf32, #tpu.memory_space<vmem>>, vector<1x1x256xf32>
      %89 = vector.shape_cast %88 : vector<1x1x256xf32> to vector<1x256xf32>
      %90 = vector.shape_cast %81 : vector<1x256xf32> to vector<1x1x256xf32>
      tpu.vector_store %arg11[%c0_36, %c0_37, %c0_38], %90 {strides = array<i32>} : memref<1x1x256xf32, #tpu.memory_space<vmem>>, vector<1x1x256xf32>,
    } else {
    }
    %c0_i32_34 = arith.constant 0 : i32
    %85 = arith.cmpi ne, %arg1, %c0_i32_34 : i32
    %86 = arith.extui %85 : i1 to i32
    %c0_i32_35 = arith.constant 0 : i32
    %87 = arith.cmpi ne, %86, %c0_i32_35 : i32
    scf.if %87 {
      %c0_36 = arith.constant 0 : index
      %c0_37 = arith.constant 0 : index
      %c0_38 = arith.constant 0 : index
      %88 = vector.load %arg11[%c0_36, %c0_37, %c0_38] : memref<1x1x256xf32, #tpu.memory_space<vmem>>, vector<1x1x256xf32>
      %89 = vector.shape_cast %88 : vector<1x1x256xf32> to vector<1x256xf32>
      %90 = arith.maximumf %89, %81 : vector<1x256xf32>
      %c0_39 = arith.constant 0 : index
      %c0_40 = arith.constant 0 : index
      %c0_41 = arith.constant 0 : index
      %91 = vector.load %arg11[%c0_39, %c0_40, %c0_41] : memref<1x1x256xf32, #tpu.memory_space<vmem>>, vector<1x1x256xf32>
      %92 = vector.shape_cast %91 : vector<1x1x256xf32> to vector<1x256xf32>
      %93 = vector.shape_cast %90 : vector<1x256xf32> to vector<1x1x256xf32>
      tpu.vector_store %arg11[%c0_39, %c0_40, %c0_41], %93 {strides = array<i32>} : memref<1x1x256xf32, #tpu.memory_space<vmem>>, vector<1x1x256xf32>,
    } else {
    }
    return
  }
  func.func @transform_0(%arg0: i32, %arg1: i32) -> (i32, i32, i32) {
    %c0_i32 = arith.constant 0 : i32
    %c0_i32_0 = arith.constant 0 : i32
    return %arg0, %arg1, %c0_i32 : i32, i32, i32
  }
  func.func @transform_1(%arg0: i32, %arg1: i32) -> (i32, i32) {
    %c0_i32 = arith.constant 0 : i32
    %c0_i32_0 = arith.constant 0 : i32
    %c0_i32_1 = arith.constant 0 : i32
    return %c0_i32, %c0_i32_0 : i32, i32
  }
  func.func @transform_2(%arg0: i32, %arg1: i32) -> (i32, i32) {
    %c0_i32 = arith.constant 0 : i32
    %c0_i32_0 = arith.constant 0 : i32
    %c0_i32_1 = arith.constant 0 : i32
    return %c0_i32, %c0_i32_0 : i32, i32
  }
  func.func @transform_3(%arg0: i32, %arg1: i32) -> (i32, i32) {
    %c0_i32 = arith.constant 0 : i32
    %c0_i32_0 = arith.constant 0 : i32
    %c0_i32_1 = arith.constant 0 : i32
    return %c0_i32, %c0_i32_0 : i32, i32
  }
  func.func @transform_4(%arg0: i32, %arg1: i32) -> (i32, i32) {
    %c0_i32 = arith.constant 0 : i32
    %c0_i32_0 = arith.constant 0 : i32
    %c0_i32_1 = arith.constant 0 : i32
    return %c0_i32, %c0_i32_0 : i32, i32
  }
  func.func @transform_5(%arg0: i32, %arg1: i32) -> (i32, i32) {
    %c0_i32 = arith.constant 0 : i32
    %c0_i32_0 = arith.constant 0 : i32
    %c0_i32_1 = arith.constant 0 : i32
    return %c0_i32, %c0_i32_0 : i32, i32
  }
  func.func @transform_6(%arg0: i32, %arg1: i32) -> (i32, i32) {
    %c0_i32 = arith.constant 0 : i32
    %c0_i32_0 = arith.constant 0 : i32
    %c0_i32_1 = arith.constant 0 : i32
    return %c0_i32, %c0_i32_0 : i32, i32
  }
  func.func @transform_7(%arg0: i32, %arg1: i32) -> (i32, i32) {
    %c0_i32 = arith.constant 0 : i32
    %c0_i32_0 = arith.constant 0 : i32
    %c0_i32_1 = arith.constant 0 : i32
    return %c0_i32, %c0_i32_0 : i32, i32
  }
  func.func @transform_8(%arg0: i32, %arg1: i32) -> (i32, i32) {
    %c0_i32 = arith.constant 0 : i32
    %c0_i32_0 = arith.constant 0 : i32
    %c0_i32_1 = arith.constant 0 : i32
    return %c0_i32, %c0_i32_0 : i32, i32
  }
  func.func @transform_9(%arg0: i32, %arg1: i32) -> (i32, i32, i32) {
    %c0_i32 = arith.constant 0 : i32
    %c0_i32_0 = arith.constant 0 : i32
    %c0_i32_1 = arith.constant 0 : i32
    return %arg0, %c0_i32, %c0_i32_0 : i32, i32, i32
  }
}

</mosaic_0001>

<llo_original>
// kernel: tpu_custom_call.1
$region0: #{tpu_custom_call.1}
  #allocation0 [shape = 'u32[]', space=smem, size = 0x4, offset = 0x4, fixed_abs, tag = 'smem constant byte address 0x4 - core index']
  #allocation1 [shape = 'u32[144,128]{1,0:T(1,128)}', space=vmem, size = 0x12000, scoped, tag = 'internal scratch']
  %s0 = inlined_call_operand.vmem [shape: f32[2,16,3], index: 0, kind: input, shape index: {}]
  %s1 = inlined_call_operand.vmem [shape: f32[3,64], index: 1, kind: input, shape index: {}]
  %s2 = inlined_call_operand.vmem [shape: f32[1,64], index: 2, kind: input, shape index: {}]
  %s3 = inlined_call_operand.vmem [shape: bf16[64,64], index: 3, kind: input, shape index: {}]
  %s4 = inlined_call_operand.vmem [shape: f32[1,64], index: 4, kind: input, shape index: {}]
  %s5 = inlined_call_operand.hbm [shape: bf16[64,128], index: 5, kind: input, shape index: {}]
  %s6 = inlined_call_operand.vmem [shape: f32[1,128], index: 6, kind: input, shape index: {}]
  %s7 = inlined_call_operand.hbm [shape: bf16[128,256], index: 7, kind: input, shape index: {}]
  %s8 = inlined_call_operand.vmem [shape: f32[1,256], index: 8, kind: input, shape index: {}]
  %s9 = inlined_call_operand.hbm [shape: f32[2,1,256], index: 9, kind: output, shape index: {}]
  %s10 = sld [smem:[#allocation0]]
  $region85: #{tpu_custom_call.1} parent=0
    _
  %s12 = ssub.s32 1, %s10
  %s13 = scalar_select 0, %s12, %s10
  $region1: #{tpu_custom_call.1} parent=0
    #allocation2 [shape = 'u8[16384]{0}', space=vmem, size = 0x4000, scoped, tag = 'input window, operand 5, single buffered']
    #allocation3 [shape = 's32[2]{0}', space=sflag, size = 0x8, scoped, tag = 'scoped memory for tpu_custom_call.1']
    #allocation4 [shape = 's32[2]{0}', space=sflag, size = 0x8, scoped, tag = 'scoped memory for tpu_custom_call.1']
    #allocation5 [shape = 'u8[65536]{0}', space=vmem, size = 0x10000, scoped, tag = 'input window, operand 7, single buffered']
    #allocation6 [shape = 's32[1]{0}', space=sflag, size = 0x4, scoped, tag = 'scoped memory for tpu_custom_call.1']
    #allocation7 [shape = 'u8[2048]{0}', space=vmem, size = 0x800, scoped, tag = 'output window, operand 0']
    %14 = vsyncpa [#allocation3], 0
    %15 = vsyncpa [#allocation6], 0
    %16 = vsyncpa [#allocation4], 0
    %s17 = scalar_lea.sflag [#allocation4], 1
    %18 = vsyncpa %s17, 0
    loop: start=0, step=1, limit=4
    $region2: #{tpu_custom_call.1} parent=1 // loop_pre_header
      _
    $region3: #{tpu_custom_call.1} parent=1 // loop_header
      %s20 = sphi 0, %s24
      %p21 = scmp.ge.s32.totalorder %s20, 4
      %s27 = sphi 0, %s39
      %s28 = sphi 0, %s35
      %s29 = sphi 0, %s27
      %s30 = sphi 0, %s28
      %s31 = sphi 0, %s29
      %s32 = sphi 0, %s30
      %s44 = sphi 0, %s46
      %s47 = sphi 0, %s44
      %s48 = sphi 0, %s47
      %s64 = sphi 0, %s48
      %s68 = sphi 0, %s68
      %s70 = sphi 0, %s68
      %s71 = sphi 0, %s70
      %s85 = sphi 0, %s71
      %s89 = sphi 0, %s89
      %s91 = sphi 0, %s89
      %s92 = sphi 0, %s91
      %s106 = sphi 0, %s92
      %s110 = sphi 0, %s110
      %s112 = sphi 0, %s110
      %s113 = sphi 0, %s112
      %s127 = sphi 0, %s113
      %s131 = sphi 0, %s131
      %s133 = sphi 0, %s131
      %s134 = sphi 0, %s133
      %s148 = sphi 0, %s134
      %s152 = sphi 0, %s152
      %s154 = sphi 0, %s152
      %s155 = sphi 0, %s154
      %s169 = sphi 0, %s155
      %s173 = sphi 0, %s173
      %s175 = sphi 0, %s173
      %s176 = sphi 0, %s175
      %s190 = sphi 0, %s176
      %s194 = sphi 0, %s194
      %s196 = sphi 0, %s194
      %s197 = sphi 0, %s196
      %s211 = sphi 0, %s197
      %s215 = sphi 0, %s215
      %s217 = sphi 0, %s215
      %s218 = sphi 0, %s217
      %s232 = sphi 0, %s218
      %s238 = sphi 0, %s240
      %s241 = sphi 0, %s238
      %s242 = sphi 0, %s241
      %s258 = sphi 0, %s242
    $region4: #{tpu_custom_call.1} parent=1 // loop_header_branch
      %23 = sbr.rel (%p21) target = $region8
    $region5: #{tpu_custom_call.1} parent=1 // loop_body
      %s25 = ssub.s32 %s20, 1
      %s26 = ssub.s32 %s20, 2
      %s33 = sadd.s32 1, %s28
      %p34 = scmp.ge.s32.totalorder %s33, 1
      %s35 = scalar_select %p34, 0, %s33
      %s36 = sadd.s32 1, %s27
      %s37 = scalar_select %p34, %s36, %s27
      %p38 = scmp.ge.s32.totalorder %s37, 2
      %s39 = scalar_select %p38, 0, %s37
      %s40 = ssub.s32 %s27, %s39
      %s41 = ssub.s32 %s28, %s35
      %s42 = sor.u32 %s40, %s41
      %p43 = scmp.eq.s32.totalorder %s42, 0
      %s45 = sadd.s32 %s44, 1
      %s46 = scalar_select %p43, %s44, %s45
      %p49 = pneg %p43
      %p50 = scmp.eq.s32.totalorder %s20, 1
      %p51 = por %p49, %p50
      %p52 = scmp.ne.s32.totalorder %s44, %s47
      %p53 = scmp.eq.s32.totalorder %s20, 0
      %p54 = por %p52, %p53
      %p55 = scmp.ne.s32.totalorder %s44, %s47
      %p56 = scmp.eq.s32.totalorder %s25, 1
      %p57 = por %p55, %p56
      %p58 = scmp.ne.s32.totalorder %s47, %s48
      %p59 = scmp.eq.s32.totalorder %s25, 0
      %p60 = por %p58, %p59
      %p61 = scmp.ne.s32.totalorder %s47, %s48
      %p62 = scmp.eq.s32.totalorder %s26, 1
      %p63 = por %p61, %p62
      %p65 = scmp.ne.s32.totalorder %s48, %s64
      %p66 = scmp.eq.s32.totalorder %s26, 0
      %p67 = por %p65, %p66
      %s69 = sadd.s32 %s68, 1
      %p72 = scmp.eq.s32.totalorder %s20, 1
      %p73 = scmp.ne.s32.totalorder %s68, %s70
      %p74 = scmp.eq.s32.totalorder %s20, 0
      %p75 = por %p73, %p74
      %p76 = scmp.ne.s32.totalorder %s68, %s70
      %p77 = scmp.eq.s32.totalorder %s25, 1
      %p78 = por %p76, %p77
      %p79 = scmp.ne.s32.totalorder %s70, %s71
      %p80 = scmp.eq.s32.totalorder %s25, 0
      %p81 = por %p79, %p80
      %p82 = scmp.ne.s32.totalorder %s70, %s71
      %p83 = scmp.eq.s32.totalorder %s26, 1
      %p84 = por %p82, %p83
      %p86 = scmp.ne.s32.totalorder %s71, %s85
      %p87 = scmp.eq.s32.totalorder %s26, 0
      %p88 = por %p86, %p87
      %s90 = sadd.s32 %s89, 1
      %p93 = scmp.eq.s32.totalorder %s20, 1
      %p94 = scmp.ne.s32.totalorder %s89, %s91
      %p95 = scmp.eq.s32.totalorder %s20, 0
      %p96 = por %p94, %p95
      %p97 = scmp.ne.s32.totalorder %s89, %s91
      %p98 = scmp.eq.s32.totalorder %s25, 1
      %p99 = por %p97, %p98
      %p100 = scmp.ne.s32.totalorder %s91, %s92
      %p101 = scmp.eq.s32.totalorder %s25, 0
      %p102 = por %p100, %p101
      %p103 = scmp.ne.s32.totalorder %s91, %s92
      %p104 = scmp.eq.s32.totalorder %s26, 1
      %p105 = por %p103, %p104
      %p107 = scmp.ne.s32.totalorder %s92, %s106
      %p108 = scmp.eq.s32.totalorder %s26, 0
      %p109 = por %p107, %p108
      %s111 = sadd.s32 %s110, 1
      %p114 = scmp.eq.s32.totalorder %s20, 1
      %p115 = scmp.ne.s32.totalorder %s110, %s112
      %p116 = scmp.eq.s32.totalorder %s20, 0
      %p117 = por %p115, %p116
      %p118 = scmp.ne.s32.totalorder %s110, %s112
      %p119 = scmp.eq.s32.totalorder %s25, 1
      %p120 = por %p118, %p119
      %p121 = scmp.ne.s32.totalorder %s112, %s113
      %p122 = scmp.eq.s32.totalorder %s25, 0
      %p123 = por %p121, %p122
      %p124 = scmp.ne.s32.totalorder %s112, %s113
      %p125 = scmp.eq.s32.totalorder %s26, 1
      %p126 = por %p124, %p125
      %p128 = scmp.ne.s32.totalorder %s113, %s127
      %p129 = scmp.eq.s32.totalorder %s26, 0
      %p130 = por %p128, %p129
      %s132 = sadd.s32 %s131, 1
      %p135 = scmp.eq.s32.totalorder %s20, 1
      %p136 = scmp.ne.s32.totalorder %s131, %s133
      %p137 = scmp.eq.s32.totalorder %s20, 0
      %p138 = por %p136, %p137
      %p139 = scmp.ne.s32.totalorder %s131, %s133
      %p140 = scmp.eq.s32.totalorder %s25, 1
      %p141 = por %p139, %p140
      %p142 = scmp.ne.s32.totalorder %s133, %s134
      %p143 = scmp.eq.s32.totalorder %s25, 0
      %p144 = por %p142, %p143
      %p145 = scmp.ne.s32.totalorder %s133, %s134
      %p146 = scmp.eq.s32.totalorder %s26, 1
      %p147 = por %p145, %p146
      %p149 = scmp.ne.s32.totalorder %s134, %s148
      %p150 = scmp.eq.s32.totalorder %s26, 0
      %p151 = por %p149, %p150
      %s153 = sadd.s32 %s152, 1
      %p156 = scmp.eq.s32.totalorder %s20, 1
      %p157 = scmp.ne.s32.totalorder %s152, %s154
      %p158 = scmp.eq.s32.totalorder %s20, 0
      %p159 = por %p157, %p158
      %p160 = scmp.ne.s32.totalorder %s152, %s154
      %p161 = scmp.eq.s32.totalorder %s25, 1
      %p162 = por %p160, %p161
      %p163 = scmp.ne.s32.totalorder %s154, %s155
      %p164 = scmp.eq.s32.totalorder %s25, 0
      %p165 = por %p163, %p164
      %p166 = scmp.ne.s32.totalorder %s154, %s155
      %p167 = scmp.eq.s32.totalorder %s26, 1
      %p168 = por %p166, %p167
      %p170 = scmp.ne.s32.totalorder %s155, %s169
      %p171 = scmp.eq.s32.totalorder %s26, 0
      %p172 = por %p170, %p171
      %s174 = sadd.s32 %s173, 1
      %p177 = scmp.eq.s32.totalorder %s20, 1
      %p178 = scmp.ne.s32.totalorder %s173, %s175
      %p179 = scmp.eq.s32.totalorder %s20, 0
      %p180 = por %p178, %p179
      %p181 = scmp.ne.s32.totalorder %s173, %s175
      %p182 = scmp.eq.s32.totalorder %s25, 1
      %p183 = por %p181, %p182
      %p184 = scmp.ne.s32.totalorder %s175, %s176
      %p185 = scmp.eq.s32.totalorder %s25, 0
      %p186 = por %p184, %p185
      %p187 = scmp.ne.s32.totalorder %s175, %s176
      %p188 = scmp.eq.s32.totalorder %s26, 1
      %p189 = por %p187, %p188
      %p191 = scmp.ne.s32.totalorder %s176, %s190
      %p192 = scmp.eq.s32.totalorder %s26, 0
      %p193 = por %p191, %p192
      %s195 = sadd.s32 %s194, 1
      %p198 = scmp.eq.s32.totalorder %s20, 1
      %p199 = scmp.ne.s32.totalorder %s194, %s196
      %p200 = scmp.eq.s32.totalorder %s20, 0
      %p201 = por %p199, %p200
      %p202 = scmp.ne.s32.totalorder %s194, %s196
      %p203 = scmp.eq.s32.totalorder %s25, 1
      %p204 = por %p202, %p203
      %p205 = scmp.ne.s32.totalorder %s196, %s197
      %p206 = scmp.eq.s32.totalorder %s25, 0
      %p207 = por %p205, %p206
      %p208 = scmp.ne.s32.totalorder %s196, %s197
      %p209 = scmp.eq.s32.totalorder %s26, 1
      %p210 = por %p208, %p209
      %p212 = scmp.ne.s32.totalorder %s197, %s211
      %p213 = scmp.eq.s32.totalorder %s26, 0
      %p214 = por %p212, %p213
      %s216 = sadd.s32 %s215, 1
      %p219 = scmp.eq.s32.totalorder %s20, 1
      %p220 = scmp.ne.s32.totalorder %s215, %s217
      %p221 = scmp.eq.s32.totalorder %s20, 0
      %p222 = por %p220, %p221
      %p223 = scmp.ne.s32.totalorder %s215, %s217
      %p224 = scmp.eq.s32.totalorder %s25, 1
      %p225 = por %p223, %p224
      %p226 = scmp.ne.s32.totalorder %s217, %s218
      %p227 = scmp.eq.s32.totalorder %s25, 0
      %p228 = por %p226, %p227
      %p229 = scmp.ne.s32.totalorder %s217, %s218
      %p230 = scmp.eq.s32.totalorder %s26, 1
      %p231 = por %p229, %p230
      %p233 = scmp.ne.s32.totalorder %s218, %s232
      %p234 = scmp.eq.s32.totalorder %s26, 0
      %p235 = por %p233, %p234
      %s236 = ssub.s32 %s27, %s39
      %p237 = scmp.eq.s32.totalorder %s236, 0
      %s239 = sadd.s32 %s238, 1
      %s240 = scalar_select %p237, %s238, %s239
      %p243 = pneg %p237
      %p244 = scmp.eq.s32.totalorder %s20, 1
      %p245 = por %p243, %p244
      %p246 = scmp.ne.s32.totalorder %s238, %s241
      %p247 = scmp.eq.s32.totalorder %s20, 0
      %p248 = por %p246, %p247
      %p249 = scmp.ne.s32.totalorder %s238, %s241
      %p250 = scmp.eq.s32.totalorder %s25, 1
      %p251 = por %p249, %p250
      %p252 = scmp.ne.s32.totalorder %s241, %s242
      %p253 = scmp.eq.s32.totalorder %s25, 0
      %p254 = por %p252, %p253
      %p255 = scmp.ne.s32.totalorder %s241, %s242
      %p256 = scmp.eq.s32.totalorder %s26, 1
      %p257 = por %p255, %p256
      %p259 = scmp.ne.s32.totalorder %s242, %s258
      %p260 = scmp.eq.s32.totalorder %s26, 0
      %p261 = por %p259, %p260
      %p262 = scmp.le.s32.totalorder 1, %s20
      %p263 = scmp.lt.s32.totalorder %s20, 3
      %p264 = pnand %p262, %p263
      %p265 = pneg %p264
      // Predicated region
      $region9: #{tpu_custom_call.1} parent=5 // pred_check
        _
      $region10: #{tpu_custom_call.1} parent=5 // pred_check_branch
        %267 = sbr.rel (%p264) target = $region12
      $region11: #{tpu_custom_call.1} parent=5 // pred_region
        %s268 = ssub.s32 %s20, 1
        // Predicated region
        $region13: #{tpu_custom_call.1} parent=11 // pred_check
          %p269 = pneg %p81
        $region14: #{tpu_custom_call.1} parent=11 // pred_check_branch
          %271 = sbr.rel (%p269) target = $region16
        $region15: #{tpu_custom_call.1} parent=11 // pred_region
          _
        $region16: #{tpu_custom_call.1} parent=11 // pred_fallthru
          _
        // Predicated region
        $region17: #{tpu_custom_call.1} parent=11 // pred_check
          %p272 = pneg %p102
        $region18: #{tpu_custom_call.1} parent=11 // pred_check_branch
          %274 = sbr.rel (%p272) target = $region20
        $region19: #{tpu_custom_call.1} parent=11 // pred_region
          _
        $region20: #{tpu_custom_call.1} parent=11 // pred_fallthru
          _
        // Predicated region
        $region21: #{tpu_custom_call.1} parent=11 // pred_check
          %p275 = pneg %p123
        $region22: #{tpu_custom_call.1} parent=11 // pred_check_branch
          %277 = sbr.rel (%p275) target = $region24
        $region23: #{tpu_custom_call.1} parent=11 // pred_region
          _
        $region24: #{tpu_custom_call.1} parent=11 // pred_fallthru
          _
        // Predicated region
        $region25: #{tpu_custom_call.1} parent=11 // pred_check
          %p278 = pneg %p144
        $region26: #{tpu_custom_call.1} parent=11 // pred_check_branch
          %280 = sbr.rel (%p278) target = $region28
        $region27: #{tpu_custom_call.1} parent=11 // pred_region
          _
        $region28: #{tpu_custom_call.1} parent=11 // pred_fallthru
          _
        // Predicated region
        $region29: #{tpu_custom_call.1} parent=11 // pred_check
          %p281 = pneg %p165
        $region30: #{tpu_custom_call.1} parent=11 // pred_check_branch
          %283 = sbr.rel (%p281) target = $region32
        $region31: #{tpu_custom_call.1} parent=11 // pred_region
          %s285 = ssub.s32 512, 512
          %286 = vsyncadd [#allocation3], %s285
          %s287 = sshll.u32 [#allocation2], 4
          %s288 = int_to_ptr.vmem [resolvable:$true] %s287
          %293 = dma.hbm_to_vmem [thread:$0]  %s5, 512, %s288, [#allocation3], 64, 64, 4
        $region32: #{tpu_custom_call.1} parent=11 // pred_fallthru
          _
        // Predicated region
        $region33: #{tpu_custom_call.1} parent=11 // pred_check
          %p294 = pneg %p186
        $region34: #{tpu_custom_call.1} parent=11 // pred_check_branch
          %296 = sbr.rel (%p294) target = $region36
        $region35: #{tpu_custom_call.1} parent=11 // pred_region
          _
        $region36: #{tpu_custom_call.1} parent=11 // pred_fallthru
          _
        // Predicated region
        $region37: #{tpu_custom_call.1} parent=11 // pred_check
          %p297 = pneg %p207
        $region38: #{tpu_custom_call.1} parent=11 // pred_check_branch
          %299 = sbr.rel (%p297) target = $region40
        $region39: #{tpu_custom_call.1} parent=11 // pred_region
          %s301 = ssub.s32 2048, 2048
          %302 = vsyncadd [#allocation6], %s301
          %s303 = sshll.u32 [#allocation5], 4
          %s304 = int_to_ptr.vmem [resolvable:$true] %s303
          %309 = dma.hbm_to_vmem [thread:$0]  %s7, 2048, %s304, [#allocation6], 128, 128, 8
        $region40: #{tpu_custom_call.1} parent=11 // pred_fallthru
          _
        // Predicated region
        $region41: #{tpu_custom_call.1} parent=11 // pred_check
          %p310 = pneg %p228
        $region42: #{tpu_custom_call.1} parent=11 // pred_check_branch
          %312 = sbr.rel (%p310) target = $region44
        $region43: #{tpu_custom_call.1} parent=11 // pred_region
          _
        $region44: #{tpu_custom_call.1} parent=11 // pred_fallthru
          _
      $region12: #{tpu_custom_call.1} parent=5 // pred_fallthru
        _
      %p313 = scmp.lt.s32.totalorder %s20, 2
      // Predicated region
      $region45: #{tpu_custom_call.1} parent=5 // pred_check
        %p314 = pneg %p313
      $region46: #{tpu_custom_call.1} parent=5 // pred_check_branch
        %316 = sbr.rel (%p314) target = $region48
      $region47: #{tpu_custom_call.1} parent=5 // pred_region
        // Predicated region
        $region49: #{tpu_custom_call.1} parent=47 // pred_check
          %p317 = pneg %p54
        $region50: #{tpu_custom_call.1} parent=47 // pred_check_branch
          %319 = sbr.rel (%p317) target = $region52
        $region51: #{tpu_custom_call.1} parent=47 // pred_region
          %s320 = smul.u32 2, %s28
          %p321 = scmp.lt.s32.totalorder %s27, 1
          %s322 = scalar_select %p321, %s27, 1
          %p323 = scmp.lt.s32.totalorder %s320, 1
          %s324 = scalar_select %p323, %s320, 1
          %s325 = smul.addr %s322, 2
          %s326 = sadd.s32 %s324, %s325
          %s327 = smul.addr %s326, 8
          %s328 = scalar_lea.vmem %s0, %s327
          %s329 = smul.u32 2, %s28
        $region52: #{tpu_custom_call.1} parent=47 // pred_fallthru
          _
      $region48: #{tpu_custom_call.1} parent=5 // pred_fallthru
        _
      %p330 = scmp.le.s32.totalorder 1, %s20
      %p331 = scmp.lt.s32.totalorder %s20, 3
      %p332 = pnand %p330, %p331
      %p333 = pneg %p332
      // Predicated region
      $region53: #{tpu_custom_call.1} parent=5 // pred_check
        _
      $region54: #{tpu_custom_call.1} parent=5 // pred_check_branch
        %335 = sbr.rel (%p332) target = $region56
      $region55: #{tpu_custom_call.1} parent=5 // pred_region
        %s336 = ssub.s32 %s20, 1
        // Predicated region
        $region57: #{tpu_custom_call.1} parent=55 // pred_check
          %p337 = pneg %p165
        $region58: #{tpu_custom_call.1} parent=55 // pred_check_branch
          %339 = sbr.rel (%p337) target = $region60
        $region59: #{tpu_custom_call.1} parent=55 // pred_region
          %340 = dma.done [#allocation3], 512
        $region60: #{tpu_custom_call.1} parent=55 // pred_fallthru
          _
        // Predicated region
        $region61: #{tpu_custom_call.1} parent=55 // pred_check
          %p341 = pneg %p207
        $region62: #{tpu_custom_call.1} parent=55 // pred_check_branch
          %343 = sbr.rel (%p341) target = $region64
        $region63: #{tpu_custom_call.1} parent=55 // pred_region
          %344 = dma.done [#allocation6], 2048
        $region64: #{tpu_custom_call.1} parent=55 // pred_fallthru
          _
        %s345 = smul.u32 2, %s30
        %p346 = scmp.lt.s32.totalorder %s29, 1
        %s347 = scalar_select %p346, %s29, 1
        %p348 = scmp.lt.s32.totalorder %s345, 1
        %s349 = scalar_select %p348, %s345, 1
        %s350 = smul.addr %s347, 2
        %s351 = sadd.s32 %s349, %s350
        %s352 = smul.addr %s351, 8
        %s353 = scalar_lea.vmem %s0, %s352
        %p354 = pneg %p60
        %p355 = pneg %p57
        %p356 = pneg %p81
        %p357 = pneg %p78
        %p358 = pneg %p102
        %p359 = pneg %p99
        %p360 = pneg %p123
        %p361 = pneg %p120
        %p362 = pneg %p144
        %p363 = pneg %p141
        %p364 = pneg %p165
        %p365 = pneg %p162
        %p366 = pneg %p186
        %p367 = pneg %p183
        %p368 = pneg %p207
        %p369 = pneg %p204
        %p370 = pneg %p228
        %p371 = pneg %p225
        %p372 = pneg %p254
        %p373 = pneg %p251
        %s374 = sand.u32 %s241, 1
        %s375 = scalar_lea.sflag [#allocation4], %s374
        %s376 = sand.u32 %s241, 1
        %s377 = smul.addr %s376, 2
        %s378 = scalar_lea.vmem [#allocation7], %s377
        %s379 = smul.u32 2, %s30
        %p380 = scmp.lt.s32.totalorder %s29, 1
        %s381 = scalar_select %p380, %s29, 1
        %p382 = scmp.lt.s32.totalorder %s379, 1
        %s383 = scalar_select %p382, %s379, 1
        %s384 = smul.addr %s381, 2
        %s385 = sadd.s32 %s383, %s384
        %s386 = smul.addr %s385, 8
        %s387 = scalar_lea.vmem %s0, %s386
        %s388 = smul.u32 2, %s30
        %v390 = vld [vmem:[%s387] sm:$0xff]
        %v391 = vld [vmem:[%s387 + $0x8] sm:$0xff]
        %v392 = vld [vmem:[%s1] sm:$0x7]
        %394 = vset.pattern.permute.xlu0 0
        %395 = vperm.xlu0 %394, %v390
        %v396 = vpop.permute.xlu0 %395
        %399 = vset.pattern.permute.xlu0 0
        %400 = vperm.xlu0 %399, %v391
        %v401 = vpop.permute.xlu0 %400
        %v403 = vlaneseq
        %v404 = vshrl.u32 %v403, 7
        %v405 = vsub.s32 0, %v404
        %v406 = vrot.slane %v392, %v405
        %v407 = vmul.f32 %v396, %v406
        %v408 = vmul.f32 %v401, %v406
        %409 = vset.pattern.permute.xlu0 1
        %410 = vperm.xlu0 %409, %v390
        %v411 = vpop.permute.xlu0 %410
        %413 = vset.pattern.permute.xlu0 1
        %414 = vperm.xlu0 %413, %v391
        %v415 = vpop.permute.xlu0 %414
        %v417 = vlaneseq
        %v418 = vshrl.u32 %v417, 7
        %v419 = vsub.s32 1, %v418
        %v420 = vrot.slane %v392, %v419
        %v421 = vmul.f32 %v411, %v420
        %v422 = vmul.f32 %v415, %v420
        %v423 = vadd.f32 %v407, %v421
        %v424 = vadd.f32 %v408, %v422
        %425 = vset.pattern.permute.xlu0 2
        %426 = vperm.xlu0 %425, %v390
        %v427 = vpop.permute.xlu0 %426
        %429 = vset.pattern.permute.xlu0 2
        %430 = vperm.xlu0 %429, %v391
        %v431 = vpop.permute.xlu0 %430
        %v433 = vlaneseq
        %v434 = vshrl.u32 %v433, 7
        %v435 = vsub.s32 2, %v434
        %v436 = vrot.slane %v392, %v435
        %v437 = vmul.f32 %v427, %v436
        %v438 = vmul.f32 %v431, %v436
        %v439 = vadd.f32 %v423, %v437
        %v440 = vadd.f32 %v424, %v438
        %v441 = vld [vmem:[%s2] sm:$0x1]
        %v443 = vlaneseq
        %v444 = vshrl.u32 %v443, 7
        %v445 = vsub.s32 0, %v444
        %v446 = vrot.slane %v441, %v445
        %v448 = vadd.f32 %v439, %v446
        %v449 = vadd.f32 %v440, %v446
        %v450 = vmul.f32 %v448, 0.5
        %v451 = vmul.f32 %v449, 0.5
        %v452 = vmul.f32 %v448, 0.044715
        %v453 = vmul.f32 %v449, 0.044715
        %v454 = vmul.f32 %v452, %v448
        %v455 = vmul.f32 %v453, %v449
        %v456 = vmul.f32 %v454, %v448
        %v457 = vmul.f32 %v455, %v449
        %v458 = vadd.f32 %v448, %v456
        %v459 = vadd.f32 %v449, %v457
        %v460 = vmul.f32 %v458, 0.7978846
        %v461 = vmul.f32 %v459, 0.7978846
        %v462 = vtanh.pop %v460
        %v463 = vtanh.pop %v461
        %v464 = vadd.f32 %v462, 1.0
        %v465 = vadd.f32 %v463, 1.0
        %v466 = vmul.f32 %v450, %v464
        %v467 = vmul.f32 %v451, %v465
        %v468 = vpack.c.bf16 %v467, %v466
        %v469 = vld [vmem:[%s3] sm:$0xf]
        %v470 = vld [vmem:[%s3 + $0x4] sm:$0xf]
        %v471 = vld [vmem:[%s3 + $0x8] sm:$0xf]
        %v472 = vld [vmem:[%s3 + $0xc] sm:$0xf]
        %v473 = vld [vmem:[%s3 + $0x10] sm:$0xf]
        %v474 = vld [vmem:[%s3 + $0x14] sm:$0xf]
        %v475 = vld [vmem:[%s3 + $0x18] sm:$0xf]
        %v476 = vld [vmem:[%s3 + $0x1c] sm:$0xf]
        %v477 = vld [vmem:[%s4] sm:$0x1]
        %v479 = vlaneseq
        %v480 = vshrl.u32 %v479, 7
        %v481 = vsub.s32 0, %v480
        %v482 = vrot.slane %v477, %v481
        %v492 = vunpack.c.l.b16 %v469
        %v493 = vunpack.c.l.b16 %v470
        %v494 = vunpack.c.l.b16 %v471
        %v495 = vunpack.c.l.b16 %v472
        %v496 = vunpack.c.l.b16 %v473
        %v497 = vunpack.c.l.b16 %v474
        %v498 = vunpack.c.l.b16 %v475
        %v499 = vunpack.c.l.b16 %v476
        %v500 = vpack.c.b16 %v493, %v492
        %v501 = vpack.c.b16 %v495, %v494
        %v502 = vpack.c.b16 %v497, %v496
        %v503 = vpack.c.b16 %v499, %v498
        %vm508 = vcmask 523264
        %v510 = vsel %vm508, %v468, 0
        %512 = vmatprep.subr.bf16.mxu0 0
        %513 = vmatpush1.bf16.msra.mxu0 %v500
        %514 = vmatprep.subr.bf16.mxu0 0
        %515 = vmatpush1.bf16.msra.mxu0 %v501
        %516 = vmatprep.subr.bf16.mxu0 0
        %517 = vmatpush1.bf16.msra.mxu0 %v502
        %518 = vmatprep.subr.bf16.mxu0 0
        %519 = vmatpush1.bf16.msra.mxu0 %v503
        %520 = vmatprep.subr.bf16.mxu0 0
        %521 = vmatpush1.bf16.msra.mxu0 0
        %522 = vmatprep.subr.bf16.mxu0 0
        %523 = vmatpush1.bf16.msra.mxu0 0
        %524 = vmatprep.subr.bf16.mxu0 0
        %525 = vmatpush1.bf16.msra.mxu0 0
        %526 = vmatprep.subr.bf16.mxu0 0
        %527 = vmatpush1.bf16.msra.mxu0 0
        %528 = vmatprep.subr.bf16.mxu0 0
        %529 = vmatpush1.bf16.msra.mxu0 0
        %530 = vmatprep.subr.bf16.mxu0 0
        %531 = vmatpush1.bf16.msra.mxu0 0
        %532 = vmatprep.subr.bf16.mxu0 0
        %533 = vmatpush1.bf16.msra.mxu0 0
        %534 = vmatprep.subr.bf16.mxu0 0
        %535 = vmatpush1.bf16.msra.mxu0 0
        %536 = vmatprep.subr.bf16.mxu0 0
        %537 = vmatpush1.bf16.msra.mxu0 0
        %538 = vmatprep.subr.bf16.mxu0 0
        %539 = vmatpush1.bf16.msra.mxu0 0
        %540 = vmatprep.subr.bf16.mxu0 0
        %541 = vmatpush1.bf16.msra.mxu0 0
        %542 = vmatprep.subr.bf16.mxu0 0
        %543 = vmatpush1.bf16.msra.mxu0 0
        %544 = vmatprep.mubr.bf16.mxu0 0
        %545 = vmatmul.mubr.bf16.gmra.mrb[0].mxu0 %v510
        %v546 = vpop.f32.mrb[0].mxu0
        %v547 = vadd.f32 %v482, %v546
        %v548 = vpop.f32.mrb[0].mxu0
        %v549 = vpop.f32.mrb[0].mxu0
        %v550 = vadd.f32 %v482, %v549
        %v551 = vpop.f32.mrb[0].mxu0
        %552 = vdwg.mxu0
        %v553 = vmul.f32 %v547, 0.5
        %v554 = vmul.f32 %v550, 0.5
        %v555 = vmul.f32 %v547, 0.044715
        %v556 = vmul.f32 %v550, 0.044715
        %v557 = vmul.f32 %v555, %v547
        %v558 = vmul.f32 %v556, %v550
        %v559 = vmul.f32 %v557, %v547
        %v560 = vmul.f32 %v558, %v550
        %v561 = vadd.f32 %v547, %v559
        %v562 = vadd.f32 %v550, %v560
        %v563 = vmul.f32 %v561, 0.7978846
        %v564 = vmul.f32 %v562, 0.7978846
        %v565 = vtanh.pop %v563
        %v566 = vtanh.pop %v564
        %v567 = vadd.f32 %v565, 1.0
        %v568 = vadd.f32 %v566, 1.0
        %v569 = vmul.f32 %v553, %v567
        %v570 = vmul.f32 %v554, %v568
        %v571 = vpack.c.bf16 %v570, %v569
        %v572 = vld [vmem:[#allocation2] sm:$0xf]
        %v573 = vld [vmem:[#allocation2 + $0x4] sm:$0xf]
        %v574 = vld [vmem:[#allocation2 + $0x8] sm:$0xf]
        %v575 = vld [vmem:[#allocation2 + $0xc] sm:$0xf]
        %v576 = vld [vmem:[#allocation2 + $0x10] sm:$0xf]
        %v577 = vld [vmem:[#allocation2 + $0x14] sm:$0xf]
        %v578 = vld [vmem:[#allocation2 + $0x18] sm:$0xf]
        %v579 = vld [vmem:[#allocation2 + $0x1c] sm:$0xf]
        %v580 = vld [vmem:[%s6] sm:$0x1]
        %v582 = vlaneseq
        %v583 = vshrl.u32 %v582, 7
        %v584 = vsub.s32 0, %v583
        %v585 = vrot.slane %v580, %v584
        %v595 = vunpack.c.l.b16 %v572
        %v596 = vunpack.c.l.b16 %v573
        %v597 = vunpack.c.l.b16 %v574
        %v598 = vunpack.c.l.b16 %v575
        %v599 = vunpack.c.l.b16 %v576
        %v600 = vunpack.c.l.b16 %v577
        %v601 = vunpack.c.l.b16 %v578
        %v602 = vunpack.c.l.b16 %v579
        %v603 = vpack.c.b16 %v596, %v595
        %v604 = vpack.c.b16 %v598, %v597
        %v605 = vpack.c.b16 %v600, %v599
        %v606 = vpack.c.b16 %v602, %v601
        %v612 = vsel %vm508, %v571, 0
        %614 = vmatprep.subr.bf16.mxu0 0
        %615 = vmatpush1.bf16.msra.mxu0 %v603
        %616 = vmatprep.subr.bf16.mxu0 0
        %617 = vmatpush1.bf16.msra.mxu0 %v604
        %618 = vmatprep.subr.bf16.mxu0 0
        %619 = vmatpush1.bf16.msra.mxu0 %v605
        %620 = vmatprep.subr.bf16.mxu0 0
        %621 = vmatpush1.bf16.msra.mxu0 %v606
        %622 = vmatprep.subr.bf16.mxu0 0
        %623 = vmatpush1.bf16.msra.mxu0 0
        %624 = vmatprep.subr.bf16.mxu0 0
        %625 = vmatpush1.bf16.msra.mxu0 0
        %626 = vmatprep.subr.bf16.mxu0 0
        %627 = vmatpush1.bf16.msra.mxu0 0
        %628 = vmatprep.subr.bf16.mxu0 0
        %629 = vmatpush1.bf16.msra.mxu0 0
        %630 = vmatprep.subr.bf16.mxu0 0
        %631 = vmatpush1.bf16.msra.mxu0 0
        %632 = vmatprep.subr.bf16.mxu0 0
        %633 = vmatpush1.bf16.msra.mxu0 0
        %634 = vmatprep.subr.bf16.mxu0 0
        %635 = vmatpush1.bf16.msra.mxu0 0
        %636 = vmatprep.subr.bf16.mxu0 0
        %637 = vmatpush1.bf16.msra.mxu0 0
        %638 = vmatprep.subr.bf16.mxu0 0
        %639 = vmatpush1.bf16.msra.mxu0 0
        %640 = vmatprep.subr.bf16.mxu0 0
        %641 = vmatpush1.bf16.msra.mxu0 0
        %642 = vmatprep.subr.bf16.mxu0 0
        %643 = vmatpush1.bf16.msra.mxu0 0
        %644 = vmatprep.subr.bf16.mxu0 0
        %645 = vmatpush1.bf16.msra.mxu0 0
        %646 = vmatprep.mubr.bf16.mxu0 0
        %647 = vmatmul.mubr.bf16.gmra.mrb[0].mxu0 %v612
        %v648 = vpop.f32.mrb[0].mxu0
        %v649 = vadd.f32 %v585, %v648
        %v650 = vpop.f32.mrb[0].mxu0
        %v651 = vpop.f32.mrb[0].mxu0
        %v652 = vadd.f32 %v585, %v651
        %v653 = vpop.f32.mrb[0].mxu0
        %654 = vdwg.mxu0
        %v655 = vmul.f32 %v649, 0.5
        %v656 = vmul.f32 %v652, 0.5
        %v657 = vmul.f32 %v649, 0.044715
        %v658 = vmul.f32 %v652, 0.044715
        %v659 = vmul.f32 %v657, %v649
        %v660 = vmul.f32 %v658, %v652
        %v661 = vmul.f32 %v659, %v649
        %v662 = vmul.f32 %v660, %v652
        %v663 = vadd.f32 %v649, %v661
        %v664 = vadd.f32 %v652, %v662
        %v665 = vmul.f32 %v663, 0.7978846
        %v666 = vmul.f32 %v664, 0.7978846
        %v667 = vtanh.pop %v665
        %v668 = vtanh.pop %v666
        %v669 = vadd.f32 %v667, 1.0
        %v670 = vadd.f32 %v668, 1.0
        %v671 = vmul.f32 %v655, %v669
        %v672 = vmul.f32 %v656, %v670
        %v673 = vpack.c.bf16 %v672, %v671
        %v674 = vld [vmem:[#allocation5] sm:$0xff]
        %v675 = vld [vmem:[#allocation5 + $0x8] sm:$0xff]
        %v676 = vld [vmem:[#allocation5 + $0x10] sm:$0xff]
        %v677 = vld [vmem:[#allocation5 + $0x18] sm:$0xff]
        %v678 = vld [vmem:[#allocation5 + $0x20] sm:$0xff]
        %v679 = vld [vmem:[#allocation5 + $0x28] sm:$0xff]
        %v680 = vld [vmem:[#allocation5 + $0x30] sm:$0xff]
        %v681 = vld [vmem:[#allocation5 + $0x38] sm:$0xff]
        %v682 = vld [vmem:[#allocation5 + $0x40] sm:$0xff]
        %v683 = vld [vmem:[#allocation5 + $0x48] sm:$0xff]
        %v684 = vld [vmem:[#allocation5 + $0x50] sm:$0xff]
        %v685 = vld [vmem:[#allocation5 + $0x58] sm:$0xff]
        %v686 = vld [vmem:[#allocation5 + $0x60] sm:$0xff]
        %v687 = vld [vmem:[#allocation5 + $0x68] sm:$0xff]
        %v688 = vld [vmem:[#allocation5 + $0x70] sm:$0xff]
        %v689 = vld [vmem:[#allocation5 + $0x78] sm:$0xff]
        %v690 = vld [vmem:[%s8] sm:$0x3]
        %v692 = vlaneseq
        %v693 = vshrl.u32 %v692, 7
        %v694 = vsub.s32 0, %v693
        %v695 = vrot.slane %v690, %v694
        %v696 = vlaneseq
        %v697 = vshrl.u32 %v696, 7
        %v698 = vsub.s32 1, %v697
        %v699 = vrot.slane %v690, %v698
        %v718 = vunpack.c.l.b16 %v674
        %v719 = vunpack.c.h.b16 %v674
        %v720 = vunpack.c.l.b16 %v675
        %v721 = vunpack.c.h.b16 %v675
        %v722 = vunpack.c.l.b16 %v676
        %v723 = vunpack.c.h.b16 %v676
        %v724 = vunpack.c.l.b16 %v677
        %v725 = vunpack.c.h.b16 %v677
        %v726 = vunpack.c.l.b16 %v678
        %v727 = vunpack.c.h.b16 %v678
        %v728 = vunpack.c.l.b16 %v679
        %v729 = vunpack.c.h.b16 %v679
        %v730 = vunpack.c.l.b16 %v680
        %v731 = vunpack.c.h.b16 %v680
        %v732 = vunpack.c.l.b16 %v681
        %v733 = vunpack.c.h.b16 %v681
        %v734 = vunpack.c.l.b16 %v682
        %v735 = vunpack.c.h.b16 %v682
        %v736 = vunpack.c.l.b16 %v683
        %v737 = vunpack.c.h.b16 %v683
        %v738 = vunpack.c.l.b16 %v684
        %v739 = vunpack.c.h.b16 %v684
        %v740 = vunpack.c.l.b16 %v685
        %v741 = vunpack.c.h.b16 %v685
        %v742 = vunpack.c.l.b16 %v686
        %v743 = vunpack.c.h.b16 %v686
        %v744 = vunpack.c.l.b16 %v687
        %v745 = vunpack.c.h.b16 %v687
        %v746 = vunpack.c.l.b16 %v688
        %v747 = vunpack.c.h.b16 %v688
        %v748 = vunpack.c.l.b16 %v689
        %v749 = vunpack.c.h.b16 %v689
        %v750 = vpack.c.b16 %v720, %v718
        %v751 = vpack.c.b16 %v721, %v719
        %v752 = vpack.c.b16 %v724, %v722
        %v753 = vpack.c.b16 %v725, %v723
        %v754 = vpack.c.b16 %v728, %v726
        %v755 = vpack.c.b16 %v729, %v727
        %v756 = vpack.c.b16 %v732, %v730
        %v757 = vpack.c.b16 %v733, %v731
        %v758 = vpack.c.b16 %v736, %v734
        %v759 = vpack.c.b16 %v737, %v735
        %v760 = vpack.c.b16 %v740, %v738
        %v761 = vpack.c.b16 %v741, %v739
        %v762 = vpack.c.b16 %v744, %v742
        %v763 = vpack.c.b16 %v745, %v743
        %v764 = vpack.c.b16 %v748, %v746
        %v765 = vpack.c.b16 %v749, %v747
        %782 = vmatprep.subr.bf16.mxu0 %v751
        %783 = vmatpush1.bf16.msra.mxu0 %v750
        %784 = vmatprep.subr.bf16.mxu0 %v753
        %785 = vmatpush1.bf16.msra.mxu0 %v752
        %786 = vmatprep.subr.bf16.mxu0 %v755
        %787 = vmatpush1.bf16.msra.mxu0 %v754
        %788 = vmatprep.subr.bf16.mxu0 %v757
        %789 = vmatpush1.bf16.msra.mxu0 %v756
        %790 = vmatprep.subr.bf16.mxu0 %v759
        %791 = vmatpush1.bf16.msra.mxu0 %v758
        %792 = vmatprep.subr.bf16.mxu0 %v761
        %793 = vmatpush1.bf16.msra.mxu0 %v760
        %794 = vmatprep.subr.bf16.mxu0 %v763
        %795 = vmatpush1.bf16.msra.mxu0 %v762
        %796 = vmatprep.subr.bf16.mxu0 %v765
        %797 = vmatpush1.bf16.msra.mxu0 %v764
        %798 = vmatprep.subr.bf16.mxu0 0
        %799 = vmatpush1.bf16.msra.mxu0 0
        %800 = vmatprep.subr.bf16.mxu0 0
        %801 = vmatpush1.bf16.msra.mxu0 0
        %802 = vmatprep.subr.bf16.mxu0 0
        %803 = vmatpush1.bf16.msra.mxu0 0
        %804 = vmatprep.subr.bf16.mxu0 0
        %805 = vmatpush1.bf16.msra.mxu0 0
        %806 = vmatprep.subr.bf16.mxu0 0
        %807 = vmatpush1.bf16.msra.mxu0 0
        %808 = vmatprep.subr.bf16.mxu0 0
        %809 = vmatpush1.bf16.msra.mxu0 0
        %810 = vmatprep.subr.bf16.mxu0 0
        %811 = vmatpush1.bf16.msra.mxu0 0
        %812 = vmatprep.subr.bf16.mxu0 0
        %813 = vmatpush1.bf16.msra.mxu0 0
        %814 = vmatprep.mubr.bf16.mxu0 0
        %815 = vmatmul.mubr.bf16.gmra.mrb[0].mxu0 %v673
        %v816 = vpop.f32.mrb[0].mxu0
        %v817 = vadd.f32 %v695, %v816
        %v818 = vpop.f32.mrb[0].mxu0
        %v819 = vadd.f32 %v699, %v818
        %v820 = vpop.f32.mrb[0].mxu0
        %v821 = vadd.f32 %v695, %v820
        %v822 = vpop.f32.mrb[0].mxu0
        %v823 = vadd.f32 %v699, %v822
        %824 = vdwg.mxu0
        %v825 = vmax.f32 %v817, %v821
        %v826 = vrot.slane %v825, 4
        %v827 = vmax.f32 %v825, %v826
        %v828 = vrot.slane %v827, 2
        %v829 = vmax.f32 %v827, %v828
        %v830 = vrot.slane %v829, 1
        %v831 = vmax.f32 %v829, %v830
        %v832 = vmax.f32 %v819, %v823
        %v833 = vrot.slane %v832, 4
        %v834 = vmax.f32 %v832, %v833
        %v835 = vrot.slane %v834, 2
        %v836 = vmax.f32 %v834, %v835
        %v837 = vrot.slane %v836, 1
        %v838 = vmax.f32 %v836, %v837
        %p839 = scmp.eq.s32.totalorder %s30, 0
        // Predicated region
        $region65: #{tpu_custom_call.1} parent=55 // pred_check
          %p840 = pneg %p839
        $region66: #{tpu_custom_call.1} parent=55 // pred_check_branch
          %842 = sbr.rel (%p840) target = $region68
        $region67: #{tpu_custom_call.1} parent=55 // pred_region
          %v845 = vcombine.low %v831, %v838
          %v847 = vunpack.c.l.s4 1966171168
          %v848 = vunpack.c.0.s8 %v847
          %v849 = vlaneseq
          %v850 = vshrl.u32 %v849, 7
          %v851 = vsub.s32 %v848, %v850
          %v852 = vrot.slane %v845, %v851
          %v854 = vunpack.c.l.s4 1966171168
          %v855 = vunpack.c.0.s8 %v854
          %v856 = vlaneseq
          %v857 = vshrl.u32 %v856, 7
          %v858 = vsub.s32 %v855, %v857
          %v859 = vrot.slane %v852, %v858
          %v861 = vlaneseq
          %vm862 = vcmp.ge.s32.totalorder %v861, 0
          %vm863 = vcmp.lt.s32.totalorder %v861, 256
          %vm864 = vmand %vm862, %vm863
          %865 = vst.msk [vmem:[%s378] sm:$0x3] %vm864, %v859
        $region68: #{tpu_custom_call.1} parent=55 // pred_fallthru
          _
        %p866 = scmp.ne.s32.totalorder %s30, 0
        // Predicated region
        $region69: #{tpu_custom_call.1} parent=55 // pred_check
          %p867 = pneg %p866
        $region70: #{tpu_custom_call.1} parent=55 // pred_check_branch
          %869 = sbr.rel (%p867) target = $region72
        $region71: #{tpu_custom_call.1} parent=55 // pred_region
          %v870 = vld [vmem:[%s378] sm:$0x3]
          %v873 = vcombine.low %v831, %v838
          %v875 = vunpack.c.l.s4 1966171168
          %v876 = vunpack.c.0.s8 %v875
          %v877 = vlaneseq
          %v878 = vshrl.u32 %v877, 7
          %v879 = vsub.s32 %v876, %v878
          %v880 = vrot.slane %v873, %v879
          %v882 = vunpack.c.l.s4 1966171168
          %v883 = vunpack.c.0.s8 %v882
          %v884 = vlaneseq
          %v885 = vshrl.u32 %v884, 7
          %v886 = vsub.s32 %v883, %v885
          %v887 = vrot.slane %v880, %v886
          %v889 = vmax.f32 %v870, %v887
          %v890 = vlaneseq
          %vm891 = vcmp.ge.s32.totalorder %v890, 0
          %vm892 = vcmp.lt.s32.totalorder %v890, 256
          %vm893 = vmand %vm891, %vm892
          %894 = vst.msk [vmem:[%s378] sm:$0x3] %vm893, %v889
        $region72: #{tpu_custom_call.1} parent=55 // pred_fallthru
          _
        %s895 = sand.u32 %s241, 1
        %s896 = scalar_lea.sflag [#allocation4], %s895
        %s897 = sand.u32 %s241, 1
        %s898 = smul.addr %s897, 2
        %s899 = scalar_lea.vmem [#allocation7], %s898
        // Predicated region
        $region73: #{tpu_custom_call.1} parent=55 // pred_check
          %p900 = pneg %p251
        $region74: #{tpu_custom_call.1} parent=55 // pred_check_branch
          %902 = sbr.rel (%p900) target = $region76
        $region75: #{tpu_custom_call.1} parent=55 // pred_region
          %s904 = ssub.s32 32, 32
          %905 = vsyncadd %s896, %s904
          %s906 = smul.addr %s29, 2
          %s907 = smul.addr %s906, 16
          %s908 = scalar_lea.hbm %s9, %s907
          %s910 = sshll.u32 %s899, 4
          %s911 = int_to_ptr.vmem [resolvable:$true] %s910
          %913 = dma.vmem_to_hbm [thread:$0]  %s911, 32, %s908, %s896
        $region76: #{tpu_custom_call.1} parent=55 // pred_fallthru
          _
      $region56: #{tpu_custom_call.1} parent=5 // pred_fallthru
        _
      %p914 = scmp.le.s32.totalorder 2, %s20
      // Predicated region
      $region77: #{tpu_custom_call.1} parent=5 // pred_check
        %p915 = pneg %p914
      $region78: #{tpu_custom_call.1} parent=5 // pred_check_branch
        %917 = sbr.rel (%p915) target = $region80
      $region79: #{tpu_custom_call.1} parent=5 // pred_region
        %s918 = ssub.s32 %s20, 2
        // Predicated region
        $region81: #{tpu_custom_call.1} parent=79 // pred_check
          %p919 = pneg %p257
        $region82: #{tpu_custom_call.1} parent=79 // pred_check_branch
          %921 = sbr.rel (%p919) target = $region84
        $region83: #{tpu_custom_call.1} parent=79 // pred_region
          %s922 = sand.u32 %s242, 1
          %s923 = scalar_lea.sflag [#allocation4], %s922
          %s924 = sand.u32 %s242, 1
          %s925 = smul.addr %s924, 2
          %s926 = scalar_lea.vmem [#allocation7], %s925
          %927 = dma.done %s923, 32
        $region84: #{tpu_custom_call.1} parent=79 // pred_fallthru
          _
      $region80: #{tpu_custom_call.1} parent=5 // pred_fallthru
        _
    $region6: #{tpu_custom_call.1} parent=1 // loop_footer
      %s24 = sadd.s32 1, %s20
    $region7: #{tpu_custom_call.1} parent=1 // loop_footer_branch
      %19 = sbr.rel target = $region3
    $region8: #{tpu_custom_call.1} parent=1 // loop_exit
      _
    %928 = vsyncpa [#allocation3], 1
    %s929 = scalar_lea.sflag [#allocation3], 1
    %930 = vsyncpa %s929, 1
    %931 = vsyncpa [#allocation6], 1
    %932 = vsyncpa [#allocation4], 1
    %s933 = scalar_lea.sflag [#allocation4], 1
    %934 = vsyncpa %s933, 1

</llo_original>
